<compile_context>
chip_gen: v7x
topology: tpu7x:2x2x1
jax: 0.10.0
libtpu: 0.0.40
codegen_flags: <defaults>
</compile_context>

<pallas_src>
import functools

import jax
import jax.numpy as jnp
from jax.experimental import pallas as pl
from jax.experimental.pallas import tpu as pltpu


def decoder_kernel(z_ref, w1_ref, b1_ref, w2_ref, b2_ref, w3_ref, b3_ref,
                   out_ref):
    # Layer 1: (T, P*L) @ (P*L, P*H) + (1, P*H) -> tanh
    h1 = jnp.tanh(
        jnp.dot(z_ref[...], w1_ref[...], preferred_element_type=jnp.float32)
        + b1_ref[...])
    # Layer 2: (T, P*H) @ (P*H, P*H) + (1, P*H) -> tanh   (MXU-native 256x256)
    h2 = jnp.tanh(
        jnp.dot(h1, w2_ref[...], preferred_element_type=jnp.float32)
        + b2_ref[...])
    # Layer 3: (T, P*H) @ (P*H, P*D) + (1, P*D)   (no activation)
    out = (jnp.dot(h2, w3_ref[...], preferred_element_type=jnp.float32)
           + b3_ref[...])
    out_ref[...] = out.astype(out_ref.dtype)


def _pack_params(params, pack):
    """Block-diagonal weights / tiled biases for the P-row-packed layout."""
    w1, b1, w2, b2, w3, b3 = params
    eye = jnp.eye(pack, dtype=jnp.float32)
    w1p = jnp.kron(eye, w1)          # (P*L, P*H)
    w2p = jnp.kron(eye, w2)          # (P*H, P*H)
    w3p = jnp.kron(eye, w3)          # (P*H, P*D)
    b1p = jnp.tile(b1, (1, pack))    # (1, P*H)
    b2p = jnp.tile(b2, (1, pack))    # (1, P*H)
    b3p = jnp.tile(b3, (1, pack))    # (1, P*D)
    return w1p, b1p, w2p, b2p, w3p, b3p


@functools.partial(jax.jit, static_argnames=("tile_r", "pack"))
def decoder_forward(z, params, *, tile_r=None, pack=None):
    """z: (N, latent_dim) float32.  Returns (N, input_dim) float32."""
    w1, b1, w2, b2, w3, b3 = params
    N, L = z.shape
    H = w1.shape[1]
    D = w3.shape[1]

    # Pack P=8 batch rows per kernel row when the feature dims are small, so
    # activations and (especially) the output are lane-dense.  For large
    # feature dims (>128 lanes) packing is unnecessary and would inflate the
    # block-diagonal weights, so fall back to P=1 (plain layout).
    if pack is None:
        pack = 8 if max(L, H, D) <= 128 else 1
    P = pack

    # In production the packed params would be precomputed once, not per call.
    w1p, b1p, w2p, b2p, w3p, b3p = _pack_params(params, P)

    # Batch tiling over packed rows: big tiles amortize per-step overhead,
    # >=2 steps (when possible) keeps both v7x TensorCores busy, cap at 512
    # packed rows (= 4096 batch rows) which is well inside VMEM on every gen.
    R = pl.cdiv(N, P)                        # packed rows needed
    if tile_r is None:
        tile_r = min(512, max(8, 8 * pl.cdiv(pl.cdiv(R, 2), 8)))
    assert tile_r % 8 == 0, "tile_r must be a multiple of 8 (sublane tiling)"
    R_pad = tile_r * pl.cdiv(R, tile_r)
    n_pad = R_pad * P

    zp = z if n_pad == N else jnp.pad(z, ((0, n_pad - N), (0, 0)))
    zp = zp.reshape(R_pad, P * L)            # lane-dense packed input

    grid = (R_pad // tile_r,)

    # Weights/biases use constant index_maps so they stay resident in VMEM
    # across all grid steps (they are KB-scale here, so the default
    # double-buffering of these resident blocks is negligible).
    in_specs = [
        pl.BlockSpec((tile_r, P * L), lambda i: (i, 0)),   # packed z
        pl.BlockSpec((P * L, P * H), lambda i: (0, 0)),    # w1 (block-diag)
        pl.BlockSpec((1, P * H), lambda i: (0, 0)),        # b1 (tiled)
        pl.BlockSpec((P * H, P * H), lambda i: (0, 0)),    # w2 (block-diag)
        pl.BlockSpec((1, P * H), lambda i: (0, 0)),        # b2 (tiled)
        pl.BlockSpec((P * H, P * D), lambda i: (0, 0)),    # w3 (block-diag)
        pl.BlockSpec((1, P * D), lambda i: (0, 0)),        # b3 (tiled)
    ]
    out_spec = pl.BlockSpec((tile_r, P * D), lambda i: (i, 0))

    out_packed = pl.pallas_call(
        decoder_kernel,
        out_shape=jax.ShapeDtypeStruct((R_pad, P * D), jnp.float32),
        grid=grid,
        in_specs=in_specs,
        out_specs=out_spec,
        compiler_params=pltpu.CompilerParams(
            dimension_semantics=("parallel",),
            # Generous but safe bound on every generation (v7x has 64 MiB
            # physical per TC); actual usage at these shapes is ~1 MiB.
            vmem_limit_bytes=32 * 1024 * 1024,
        ),
    )(zp, w1p, b1p, w2p, b2p, w3p, b3p)

    # Undo the wrapper-side packing / padding.
    out = out_packed.reshape(n_pad, D)
    return out[:N]


def init_decoder_params(key, latent_dim, input_dim, hidden_dim):
    """Deterministic synthetic init (shapes match the PyTorch module)."""
    k1, k2, k3, k4, k5, k6 = jax.random.split(key, 6)
    # Stored as (in, out) so y = x @ W + b; biases kept 2D (1, out).
    w1 = jax.random.normal(k1, (latent_dim, hidden_dim), jnp.float32) * 0.1
    b1 = jax.random.normal(k2, (1, hidden_dim), jnp.float32) * 0.01
    w2 = jax.random.normal(k3, (hidden_dim, hidden_dim), jnp.float32) * 0.1
    b2 = jax.random.normal(k4, (1, hidden_dim), jnp.float32) * 0.01
    w3 = jax.random.normal(k5, (hidden_dim, input_dim), jnp.float32) * 0.1
    b3 = jax.random.normal(k6, (1, input_dim), jnp.float32) * 0.01
    return (w1, b1, w2, b2, w3, b3)


def decoder_reference(z, params):
    w1, b1, w2, b2, w3, b3 = params
    h1 = jnp.tanh(z @ w1 + b1)
    h2 = jnp.tanh(h1 @ w2 + b2)
    return h2 @ w3 + b3


if __name__ == "__main__":
    # Shapes consistent with the module: the source uses z = randn(214, 2),
    # i.e. latent_dim=2, batch=214 (not a multiple of 8 -> exercises padding).
    latent_dim, input_dim, hidden_dim = 2, 16, 32
    N = 214

    key = jax.random.PRNGKey(0)
    kz, kp = jax.random.split(key)
    z = jax.random.normal(kz, (N, latent_dim), jnp.float32)
    params = init_decoder_params(kp, latent_dim, input_dim, hidden_dim)

    out = decoder_forward(z, params)
    out = jax.block_until_ready(out)

    ref = decoder_reference(z, params)
    assert out.shape == (N, input_dim)
    assert jnp.allclose(out, ref, atol=1e-5, rtol=1e-5)

    print("KERNEL_OK")
</pallas_src>

<mosaic_0001>
module attributes {stable_mosaic.version = 11 : i64} {
  func.func @decoder_kernel(%arg0: i32, %arg1: memref<16x16xf32, #tpu.memory_space<vmem>>, %arg2: memref<16x256xf32, #tpu.memory_space<vmem>>, %arg3: memref<1x256xf32, #tpu.memory_space<vmem>>, %arg4: memref<256x256xf32, #tpu.memory_space<vmem>>, %arg5: memref<1x256xf32, #tpu.memory_space<vmem>>, %arg6: memref<256x128xf32, #tpu.memory_space<vmem>>, %arg7: memref<1x128xf32, #tpu.memory_space<vmem>>, %arg8: memref<16x128xf32, #tpu.memory_space<vmem>>) attributes {dimension_semantics = [#tpu.dimension_semantics<parallel>], iteration_bounds = array<i64: 2>, scalar_prefetch = 0 : i64, scratch_operands = 0 : i64, tpu.core_type = #tpu.core_type<tc>, window_params = [{transform_indices = @transform_0, window_bounds = array<i64: 16, 16>}, {pipeline_mode = #tpu.pipeline_mode<synchronous>, transform_indices = @transform_1, window_bounds = array<i64: 16, 256>}, {pipeline_mode = #tpu.pipeline_mode<synchronous>, transform_indices = @transform_2, window_bounds = array<i64: 1, 256>}, {pipeline_mode = #tpu.pipeline_mode<synchronous>, transform_indices = @transform_3, window_bounds = array<i64: 256, 256>}, {pipeline_mode = #tpu.pipeline_mode<synchronous>, transform_indices = @transform_4, window_bounds = array<i64: 1, 256>}, {pipeline_mode = #tpu.pipeline_mode<synchronous>, transform_indices = @transform_5, window_bounds = array<i64: 256, 128>}, {pipeline_mode = #tpu.pipeline_mode<synchronous>, transform_indices = @transform_6, window_bounds = array<i64: 1, 128>}, {transform_indices = @transform_7, window_bounds = array<i64: 16, 128>}]} {
    %c0 = arith.constant 0 : index
    %c0_0 = arith.constant 0 : index
    %0 = vector.load %arg1[%c0, %c0_0] : memref<16x16xf32, #tpu.memory_space<vmem>>, vector<16x16xf32>
    %c0_1 = arith.constant 0 : index
    %c0_2 = arith.constant 0 : index
    %1 = vector.load %arg2[%c0_1, %c0_2] : memref<16x256xf32, #tpu.memory_space<vmem>>, vector<16x256xf32>
    %cst = arith.constant dense<0.000000e+00> : vector<16x256xf32>
    %2 = tpu.matmul %0, %1, %cst {dimension_numbers = #tpu.dot_dimension_numbers<[1], [0], [0], [1], [0, 0, 1, 1], [], []>} : vector<16x16xf32>, vector<16x256xf32>, vector<16x256xf32> -> vector<16x256xf32>
    %c0_3 = arith.constant 0 : index
    %c0_4 = arith.constant 0 : index
    %3 = vector.load %arg3[%c0_3, %c0_4] : memref<1x256xf32, #tpu.memory_space<vmem>>, vector<1x256xf32>
    %4 = vector.broadcast %3 : vector<1x256xf32> to vector<16x256xf32>
    %5 = arith.addf %2, %4 : vector<16x256xf32>
    %6 = math.tanh %5 : vector<16x256xf32>
    %c0_5 = arith.constant 0 : index
    %c0_6 = arith.constant 0 : index
    %7 = vector.load %arg4[%c0_5, %c0_6] : memref<256x256xf32, #tpu.memory_space<vmem>>, vector<256x256xf32>
    %cst_7 = arith.constant dense<0.000000e+00> : vector<16x256xf32>
    %8 = tpu.matmul %6, %7, %cst_7 {dimension_numbers = #tpu.dot_dimension_numbers<[1], [0], [0], [1], [0, 0, 1, 1], [], []>} : vector<16x256xf32>, vector<256x256xf32>, vector<16x256xf32> -> vector<16x256xf32>
    %c0_8 = arith.constant 0 : index
    %c0_9 = arith.constant 0 : index
    %9 = vector.load %arg5[%c0_8, %c0_9] : memref<1x256xf32, #tpu.memory_space<vmem>>, vector<1x256xf32>
    %10 = vector.broadcast %9 : vector<1x256xf32> to vector<16x256xf32>
    %11 = arith.addf %8, %10 : vector<16x256xf32>
    %12 = math.tanh %11 : vector<16x256xf32>
    %c0_10 = arith.constant 0 : index
    %c0_11 = arith.constant 0 : index
    %13 = vector.load %arg6[%c0_10, %c0_11] : memref<256x128xf32, #tpu.memory_space<vmem>>, vector<256x128xf32>
    %cst_12 = arith.constant dense<0.000000e+00> : vector<16x128xf32>
    %14 = tpu.matmul %12, %13, %cst_12 {dimension_numbers = #tpu.dot_dimension_numbers<[1], [0], [0], [1], [0, 0, 1, 1], [], []>} : vector<16x256xf32>, vector<256x128xf32>, vector<16x128xf32> -> vector<16x128xf32>
    %c0_13 = arith.constant 0 : index
    %c0_14 = arith.constant 0 : index
    %15 = vector.load %arg7[%c0_13, %c0_14] : memref<1x128xf32, #tpu.memory_space<vmem>>, vector<1x128xf32>
    %16 = vector.broadcast %15 : vector<1x128xf32> to vector<16x128xf32>
    %17 = arith.addf %14, %16 : vector<16x128xf32>
    %c0_15 = arith.constant 0 : index
    %c0_16 = arith.constant 0 : index
    %18 = vector.load %arg8[%c0_15, %c0_16] : memref<16x128xf32, #tpu.memory_space<vmem>>, vector<16x128xf32>
    tpu.vector_store %arg8[%c0_15, %c0_16], %17 {strides = array<i32>} : memref<16x128xf32, #tpu.memory_space<vmem>>, vector<16x128xf32>,
    return
  }
  func.func @transform_0(%arg0: i32) -> (i32, i32) {
    %c0_i32 = arith.constant 0 : i32
    %c0_i32_0 = arith.constant 0 : i32
    return %arg0, %c0_i32 : i32, i32
  }
  func.func @transform_1(%arg0: i32) -> (i32, i32) {
    %c0_i32 = arith.constant 0 : i32
    %c0_i32_0 = arith.constant 0 : i32
    %c0_i32_1 = arith.constant 0 : i32
    return %c0_i32, %c0_i32_0 : i32, i32
  }
  func.func @transform_2(%arg0: i32) -> (i32, i32) {
    %c0_i32 = arith.constant 0 : i32
    %c0_i32_0 = arith.constant 0 : i32
    %c0_i32_1 = arith.constant 0 : i32
    return %c0_i32, %c0_i32_0 : i32, i32
  }
  func.func @transform_3(%arg0: i32) -> (i32, i32) {
    %c0_i32 = arith.constant 0 : i32
    %c0_i32_0 = arith.constant 0 : i32
    %c0_i32_1 = arith.constant 0 : i32
    return %c0_i32, %c0_i32_0 : i32, i32
  }
  func.func @transform_4(%arg0: i32) -> (i32, i32) {
    %c0_i32 = arith.constant 0 : i32
    %c0_i32_0 = arith.constant 0 : i32
    %c0_i32_1 = arith.constant 0 : i32
    return %c0_i32, %c0_i32_0 : i32, i32
  }
  func.func @transform_5(%arg0: i32) -> (i32, i32) {
    %c0_i32 = arith.constant 0 : i32
    %c0_i32_0 = arith.constant 0 : i32
    %c0_i32_1 = arith.constant 0 : i32
    return %c0_i32, %c0_i32_0 : i32, i32
  }
  func.func @transform_6(%arg0: i32) -> (i32, i32) {
    %c0_i32 = arith.constant 0 : i32
    %c0_i32_0 = arith.constant 0 : i32
    %c0_i32_1 = arith.constant 0 : i32
    return %c0_i32, %c0_i32_0 : i32, i32
  }
  func.func @transform_7(%arg0: i32) -> (i32, i32) {
    %c0_i32 = arith.constant 0 : i32
    %c0_i32_0 = arith.constant 0 : i32
    return %arg0, %c0_i32 : i32, i32
  }
}

</mosaic_0001>

<llo_original>
// kernel: decoder_forward.1
$region0: #{decoder_forward.1}
  #allocation0 [shape = 'u32[]', space=smem, size = 0x4, offset = 0x4, fixed_abs, tag = 'smem constant byte address 0x4 - core index']
  #allocation1 [shape = 'u32[144,128]{1,0:T(1,128)}', space=vmem, size = 0x12000, scoped, tag = 'internal scratch']
  %s0 = inlined_call_operand.vmem [shape: f32[32,16], index: 0, kind: input, shape index: {}]
  %s1 = inlined_call_operand.vmem [shape: f32[16,256], index: 1, kind: input, shape index: {}]
  %s2 = inlined_call_operand.vmem [shape: f32[1,256], index: 2, kind: input, shape index: {}]
  %s3 = inlined_call_operand.vmem [shape: f32[256,256], index: 3, kind: input, shape index: {}]
  %s4 = inlined_call_operand.vmem [shape: f32[1,256], index: 4, kind: input, shape index: {}]
  %s5 = inlined_call_operand.vmem [shape: f32[256,128], index: 5, kind: input, shape index: {}]
  %s6 = inlined_call_operand.vmem [shape: f32[1,128], index: 6, kind: input, shape index: {}]
  %s7 = inlined_call_operand.vmem [shape: f32[32,128], index: 7, kind: output, shape index: {}]
  %s8 = sld [smem:[#allocation0]]
  $region61: #{decoder_forward.1} parent=0
    _
  %s10 = ssub.s32 1, %s8
  %s11 = scalar_select 0, %s10, %s8
  loop: start=0, step=1, limit=4
  $region2: #{decoder_forward.1} parent=0 // loop_pre_header
    _
  $region3: #{decoder_forward.1} parent=0 // loop_header
    %s13 = sphi 0, %s17
    %p14 = scmp.ge.s32.totalorder %s13, 4
    %s23 = sphi 0, %s25
    %s26 = sphi 0, %s23
    %s27 = sphi 0, %s26
    %s43 = sphi 0, %s27
    %s47 = sphi 0, %s47
    %s49 = sphi 0, %s47
    %s50 = sphi 0, %s49
    %s64 = sphi 0, %s50
    %s68 = sphi 0, %s68
    %s70 = sphi 0, %s68
    %s71 = sphi 0, %s70
    %s85 = sphi 0, %s71
    %s89 = sphi 0, %s89
    %s91 = sphi 0, %s89
    %s92 = sphi 0, %s91
    %s106 = sphi 0, %s92
    %s110 = sphi 0, %s110
    %s112 = sphi 0, %s110
    %s113 = sphi 0, %s112
    %s127 = sphi 0, %s113
    %s131 = sphi 0, %s131
    %s133 = sphi 0, %s131
    %s134 = sphi 0, %s133
    %s148 = sphi 0, %s134
    %s152 = sphi 0, %s152
    %s154 = sphi 0, %s152
    %s155 = sphi 0, %s154
    %s169 = sphi 0, %s155
    %s175 = sphi 0, %s177
    %s178 = sphi 0, %s175
    %s179 = sphi 0, %s178
    %s195 = sphi 0, %s179
  $region4: #{decoder_forward.1} parent=0 // loop_header_branch
    %16 = sbr.rel (%p14) target = $region8
  $region5: #{decoder_forward.1} parent=0 // loop_body
    %s18 = ssub.s32 %s13, 1
    %s19 = ssub.s32 %s13, 2
    %s20 = sadd.s32 %s13, 1
    %s21 = ssub.s32 %s13, %s20
    %p22 = scmp.eq.s32.totalorder %s21, 0
    %s24 = sadd.s32 %s23, 1
    %s25 = scalar_select %p22, %s23, %s24
    %p28 = pneg %p22
    %p29 = scmp.eq.s32.totalorder %s13, 1
    %p30 = por %p28, %p29
    %p31 = scmp.ne.s32.totalorder %s23, %s26
    %p32 = scmp.eq.s32.totalorder %s13, 0
    %p33 = por %p31, %p32
    %p34 = scmp.ne.s32.totalorder %s23, %s26
    %p35 = scmp.eq.s32.totalorder %s18, 1
    %p36 = por %p34, %p35
    %p37 = scmp.ne.s32.totalorder %s26, %s27
    %p38 = scmp.eq.s32.totalorder %s18, 0
    %p39 = por %p37, %p38
    %p40 = scmp.ne.s32.totalorder %s26, %s27
    %p41 = scmp.eq.s32.totalorder %s19, 1
    %p42 = por %p40, %p41
    %p44 = scmp.ne.s32.totalorder %s27, %s43
    %p45 = scmp.eq.s32.totalorder %s19, 0
    %p46 = por %p44, %p45
    %s48 = sadd.s32 %s47, 1
    %p51 = scmp.eq.s32.totalorder %s13, 1
    %p52 = scmp.ne.s32.totalorder %s47, %s49
    %p53 = scmp.eq.s32.totalorder %s13, 0
    %p54 = por %p52, %p53
    %p55 = scmp.ne.s32.totalorder %s47, %s49
    %p56 = scmp.eq.s32.totalorder %s18, 1
    %p57 = por %p55, %p56
    %p58 = scmp.ne.s32.totalorder %s49, %s50
    %p59 = scmp.eq.s32.totalorder %s18, 0
    %p60 = por %p58, %p59
    %p61 = scmp.ne.s32.totalorder %s49, %s50
    %p62 = scmp.eq.s32.totalorder %s19, 1
    %p63 = por %p61, %p62
    %p65 = scmp.ne.s32.totalorder %s50, %s64
    %p66 = scmp.eq.s32.totalorder %s19, 0
    %p67 = por %p65, %p66
    %s69 = sadd.s32 %s68, 1
    %p72 = scmp.eq.s32.totalorder %s13, 1
    %p73 = scmp.ne.s32.totalorder %s68, %s70
    %p74 = scmp.eq.s32.totalorder %s13, 0
    %p75 = por %p73, %p74
    %p76 = scmp.ne.s32.totalorder %s68, %s70
    %p77 = scmp.eq.s32.totalorder %s18, 1
    %p78 = por %p76, %p77
    %p79 = scmp.ne.s32.totalorder %s70, %s71
    %p80 = scmp.eq.s32.totalorder %s18, 0
    %p81 = por %p79, %p80
    %p82 = scmp.ne.s32.totalorder %s70, %s71
    %p83 = scmp.eq.s32.totalorder %s19, 1
    %p84 = por %p82, %p83
    %p86 = scmp.ne.s32.totalorder %s71, %s85
    %p87 = scmp.eq.s32.totalorder %s19, 0
    %p88 = por %p86, %p87
    %s90 = sadd.s32 %s89, 1
    %p93 = scmp.eq.s32.totalorder %s13, 1
    %p94 = scmp.ne.s32.totalorder %s89, %s91
    %p95 = scmp.eq.s32.totalorder %s13, 0
    %p96 = por %p94, %p95
    %p97 = scmp.ne.s32.totalorder %s89, %s91
    %p98 = scmp.eq.s32.totalorder %s18, 1
    %p99 = por %p97, %p98
    %p100 = scmp.ne.s32.totalorder %s91, %s92
    %p101 = scmp.eq.s32.totalorder %s18, 0
    %p102 = por %p100, %p101
    %p103 = scmp.ne.s32.totalorder %s91, %s92
    %p104 = scmp.eq.s32.totalorder %s19, 1
    %p105 = por %p103, %p104
    %p107 = scmp.ne.s32.totalorder %s92, %s106
    %p108 = scmp.eq.s32.totalorder %s19, 0
    %p109 = por %p107, %p108
    %s111 = sadd.s32 %s110, 1
    %p114 = scmp.eq.s32.totalorder %s13, 1
    %p115 = scmp.ne.s32.totalorder %s110, %s112
    %p116 = scmp.eq.s32.totalorder %s13, 0
    %p117 = por %p115, %p116
    %p118 = scmp.ne.s32.totalorder %s110, %s112
    %p119 = scmp.eq.s32.totalorder %s18, 1
    %p120 = por %p118, %p119
    %p121 = scmp.ne.s32.totalorder %s112, %s113
    %p122 = scmp.eq.s32.totalorder %s18, 0
    %p123 = por %p121, %p122
    %p124 = scmp.ne.s32.totalorder %s112, %s113
    %p125 = scmp.eq.s32.totalorder %s19, 1
    %p126 = por %p124, %p125
    %p128 = scmp.ne.s32.totalorder %s113, %s127
    %p129 = scmp.eq.s32.totalorder %s19, 0
    %p130 = por %p128, %p129
    %s132 = sadd.s32 %s131, 1
    %p135 = scmp.eq.s32.totalorder %s13, 1
    %p136 = scmp.ne.s32.totalorder %s131, %s133
    %p137 = scmp.eq.s32.totalorder %s13, 0
    %p138 = por %p136, %p137
    %p139 = scmp.ne.s32.totalorder %s131, %s133
    %p140 = scmp.eq.s32.totalorder %s18, 1
    %p141 = por %p139, %p140
    %p142 = scmp.ne.s32.totalorder %s133, %s134
    %p143 = scmp.eq.s32.totalorder %s18, 0
    %p144 = por %p142, %p143
    %p145 = scmp.ne.s32.totalorder %s133, %s134
    %p146 = scmp.eq.s32.totalorder %s19, 1
    %p147 = por %p145, %p146
    %p149 = scmp.ne.s32.totalorder %s134, %s148
    %p150 = scmp.eq.s32.totalorder %s19, 0
    %p151 = por %p149, %p150
    %s153 = sadd.s32 %s152, 1
    %p156 = scmp.eq.s32.totalorder %s13, 1
    %p157 = scmp.ne.s32.totalorder %s152, %s154
    %p158 = scmp.eq.s32.totalorder %s13, 0
    %p159 = por %p157, %p158
    %p160 = scmp.ne.s32.totalorder %s152, %s154
    %p161 = scmp.eq.s32.totalorder %s18, 1
    %p162 = por %p160, %p161
    %p163 = scmp.ne.s32.totalorder %s154, %s155
    %p164 = scmp.eq.s32.totalorder %s18, 0
    %p165 = por %p163, %p164
    %p166 = scmp.ne.s32.totalorder %s154, %s155
    %p167 = scmp.eq.s32.totalorder %s19, 1
    %p168 = por %p166, %p167
    %p170 = scmp.ne.s32.totalorder %s155, %s169
    %p171 = scmp.eq.s32.totalorder %s19, 0
    %p172 = por %p170, %p171
    %s173 = ssub.s32 %s13, %s20
    %p174 = scmp.eq.s32.totalorder %s173, 0
    %s176 = sadd.s32 %s175, 1
    %s177 = scalar_select %p174, %s175, %s176
    %p180 = pneg %p174
    %p181 = scmp.eq.s32.totalorder %s13, 1
    %p182 = por %p180, %p181
    %p183 = scmp.ne.s32.totalorder %s175, %s178
    %p184 = scmp.eq.s32.totalorder %s13, 0
    %p185 = por %p183, %p184
    %p186 = scmp.ne.s32.totalorder %s175, %s178
    %p187 = scmp.eq.s32.totalorder %s18, 1
    %p188 = por %p186, %p187
    %p189 = scmp.ne.s32.totalorder %s178, %s179
    %p190 = scmp.eq.s32.totalorder %s18, 0
    %p191 = por %p189, %p190
    %p192 = scmp.ne.s32.totalorder %s178, %s179
    %p193 = scmp.eq.s32.totalorder %s19, 1
    %p194 = por %p192, %p193
    %p196 = scmp.ne.s32.totalorder %s179, %s195
    %p197 = scmp.eq.s32.totalorder %s19, 0
    %p198 = por %p196, %p197
    %p199 = scmp.le.s32.totalorder 1, %s13
    %p200 = scmp.lt.s32.totalorder %s13, 3
    %p201 = pnand %p199, %p200
    %p202 = pneg %p201
    // Predicated region
    $region9: #{decoder_forward.1} parent=5 // pred_check
      _
    $region10: #{decoder_forward.1} parent=5 // pred_check_branch
      %204 = sbr.rel (%p201) target = $region12
    $region11: #{decoder_forward.1} parent=5 // pred_region
      %s205 = ssub.s32 %s13, 1
      // Predicated region
      $region13: #{decoder_forward.1} parent=11 // pred_check
        %p206 = pneg %p60
      $region14: #{decoder_forward.1} parent=11 // pred_check_branch
        %208 = sbr.rel (%p206) target = $region16
      $region15: #{decoder_forward.1} parent=11 // pred_region
        _
      $region16: #{decoder_forward.1} parent=11 // pred_fallthru
        _
      // Predicated region
      $region17: #{decoder_forward.1} parent=11 // pred_check
        %p209 = pneg %p81
      $region18: #{decoder_forward.1} parent=11 // pred_check_branch
        %211 = sbr.rel (%p209) target = $region20
      $region19: #{decoder_forward.1} parent=11 // pred_region
        _
      $region20: #{decoder_forward.1} parent=11 // pred_fallthru
        _
      // Predicated region
      $region21: #{decoder_forward.1} parent=11 // pred_check
        %p212 = pneg %p102
      $region22: #{decoder_forward.1} parent=11 // pred_check_branch
        %214 = sbr.rel (%p212) target = $region24
      $region23: #{decoder_forward.1} parent=11 // pred_region
        _
      $region24: #{decoder_forward.1} parent=11 // pred_fallthru
        _
      // Predicated region
      $region25: #{decoder_forward.1} parent=11 // pred_check
        %p215 = pneg %p123
      $region26: #{decoder_forward.1} parent=11 // pred_check_branch
        %217 = sbr.rel (%p215) target = $region28
      $region27: #{decoder_forward.1} parent=11 // pred_region
        _
      $region28: #{decoder_forward.1} parent=11 // pred_fallthru
        _
      // Predicated region
      $region29: #{decoder_forward.1} parent=11 // pred_check
        %p218 = pneg %p144
      $region30: #{decoder_forward.1} parent=11 // pred_check_branch
        %220 = sbr.rel (%p218) target = $region32
      $region31: #{decoder_forward.1} parent=11 // pred_region
        _
      $region32: #{decoder_forward.1} parent=11 // pred_fallthru
        _
      // Predicated region
      $region33: #{decoder_forward.1} parent=11 // pred_check
        %p221 = pneg %p165
      $region34: #{decoder_forward.1} parent=11 // pred_check_branch
        %223 = sbr.rel (%p221) target = $region36
      $region35: #{decoder_forward.1} parent=11 // pred_region
        _
      $region36: #{decoder_forward.1} parent=11 // pred_fallthru
        _
    $region12: #{decoder_forward.1} parent=5 // pred_fallthru
      _
    %p224 = scmp.lt.s32.totalorder %s13, 2
    // Predicated region
    $region37: #{decoder_forward.1} parent=5 // pred_check
      %p225 = pneg %p224
    $region38: #{decoder_forward.1} parent=5 // pred_check_branch
      %227 = sbr.rel (%p225) target = $region40
    $region39: #{decoder_forward.1} parent=5 // pred_region
      // Predicated region
      $region41: #{decoder_forward.1} parent=39 // pred_check
        %p228 = pneg %p33
      $region42: #{decoder_forward.1} parent=39 // pred_check_branch
        %230 = sbr.rel (%p228) target = $region44
      $region43: #{decoder_forward.1} parent=39 // pred_region
        %s231 = smul.u32 2, %s13
        %p232 = scmp.lt.s32.totalorder %s231, 3
        %s233 = scalar_select %p232, %s231, 3
        %s234 = smul.addr %s233, 8
        %s235 = scalar_lea.vmem %s0, %s234
        %s236 = smul.u32 2, %s13
      $region44: #{decoder_forward.1} parent=39 // pred_fallthru
        _
    $region40: #{decoder_forward.1} parent=5 // pred_fallthru
      _
    %p237 = scmp.le.s32.totalorder 1, %s13
    %p238 = scmp.lt.s32.totalorder %s13, 3
    %p239 = pnand %p237, %p238
    %p240 = pneg %p239
    // Predicated region
    $region45: #{decoder_forward.1} parent=5 // pred_check
      _
    $region46: #{decoder_forward.1} parent=5 // pred_check_branch
      %242 = sbr.rel (%p239) target = $region48
    $region47: #{decoder_forward.1} parent=5 // pred_region
      %s243 = ssub.s32 %s13, 1
      %s244 = smul.u32 2, %s18
      %p245 = scmp.lt.s32.totalorder %s244, 3
      %s246 = scalar_select %p245, %s244, 3
      %s247 = smul.addr %s246, 8
      %s248 = scalar_lea.vmem %s0, %s247
      %p249 = pneg %p39
      %p250 = pneg %p36
      %p251 = pneg %p60
      %p252 = pneg %p57
      %p253 = pneg %p81
      %p254 = pneg %p78
      %p255 = pneg %p102
      %p256 = pneg %p99
      %p257 = pneg %p123
      %p258 = pneg %p120
      %p259 = pneg %p144
      %p260 = pneg %p141
      %p261 = pneg %p165
      %p262 = pneg %p162
      %p263 = pneg %p191
      %p264 = pneg %p188
      %s265 = smul.u32 2, %s18
      %p266 = scmp.lt.s32.totalorder %s265, 3
      %s267 = scalar_select %p266, %s265, 3
      %s268 = smul.addr %s267, 8
      %s269 = scalar_lea.vmem %s7, %s268
      %s270 = smul.u32 2, %s18
      %p271 = scmp.lt.s32.totalorder %s270, 3
      %s272 = scalar_select %p271, %s270, 3
      %s273 = smul.addr %s272, 8
      %s274 = scalar_lea.vmem %s0, %s273
      %s275 = smul.u32 2, %s18
      %s276 = smul.u32 2, %s18
      %p277 = scmp.lt.s32.totalorder %s276, 3
      %s278 = scalar_select %p277, %s276, 3
      %s279 = smul.addr %s278, 8
      %s280 = scalar_lea.vmem %s7, %s279
      %s281 = smul.u32 2, %s18
      %v282 = vld [vmem:[%s274] sm:$0xff]
      %v283 = vld [vmem:[%s274 + $0x8] sm:$0xff]
      %v284 = vld [vmem:[%s1] sm:$0xff]
      %v285 = vld [vmem:[%s1 + $0x8] sm:$0xff]
      %v286 = vld [vmem:[%s1 + $0x10] sm:$0xff]
      %v287 = vld [vmem:[%s1 + $0x18] sm:$0xff]
      %v288 = vld [vmem:[%s2] sm:$0x3]
      %v290 = vlaneseq
      %v291 = vshrl.u32 %v290, 7
      %v292 = vsub.s32 0, %v291
      %v293 = vrot.slane %v288, %v292
      %v294 = vlaneseq
      %v295 = vshrl.u32 %v294, 7
      %v296 = vsub.s32 1, %v295
      %v297 = vrot.slane %v288, %v296
      %vm300 = vcmask 130048
      %v302 = vsel %vm300, %v282, 0
      %v305 = vsel %vm300, %v283, 0
      %307 = vmatprep.subr.mxu0 %v285
      %308 = vmatpush1.msra.mxu0 %v284
      %309 = vmatprep.subr.mxu0 %v287
      %310 = vmatpush1.msra.mxu0 %v286
      %311 = vmatprep.subr.mxu0 0.0
      %312 = vmatpush1.msra.mxu0 0.0
      %313 = vmatprep.subr.mxu0 0.0
      %314 = vmatpush1.msra.mxu0 0.0
      %315 = vmatprep.subr.mxu0 0.0
      %316 = vmatpush1.msra.mxu0 0.0
      %317 = vmatprep.subr.mxu0 0.0
      %318 = vmatpush1.msra.mxu0 0.0
      %319 = vmatprep.subr.mxu0 0.0
      %320 = vmatpush1.msra.mxu0 0.0
      %321 = vmatprep.subr.mxu0 0.0
      %322 = vmatpush1.msra.mxu0 0.0
      %323 = vmatprep.subr.mxu0 0.0
      %324 = vmatpush1.msra.mxu0 0.0
      %325 = vmatprep.subr.mxu0 0.0
      %326 = vmatpush1.msra.mxu0 0.0
      %327 = vmatprep.subr.mxu0 0.0
      %328 = vmatpush1.msra.mxu0 0.0
      %329 = vmatprep.subr.mxu0 0.0
      %330 = vmatpush1.msra.mxu0 0.0
      %331 = vmatprep.subr.mxu0 0.0
      %332 = vmatpush1.msra.mxu0 0.0
      %333 = vmatprep.subr.mxu0 0.0
      %334 = vmatpush1.msra.mxu0 0.0
      %335 = vmatprep.subr.mxu0 0.0
      %336 = vmatpush1.msra.mxu0 0.0
      %337 = vmatprep.subr.mxu0 0.0
      %338 = vmatpush1.msra.mxu0 0.0
      %339 = vmatprep.subr.mxu0 0.0
      %340 = vmatpush1.msra.mxu0 0.0
      %341 = vmatprep.subr.mxu0 0.0
      %342 = vmatpush1.msra.mxu0 0.0
      %343 = vmatprep.subr.mxu0 0.0
      %344 = vmatpush1.msra.mxu0 0.0
      %345 = vmatprep.subr.mxu0 0.0
      %346 = vmatpush1.msra.mxu0 0.0
      %347 = vmatprep.subr.mxu0 0.0
      %348 = vmatpush1.msra.mxu0 0.0
      %349 = vmatprep.subr.mxu0 0.0
      %350 = vmatpush1.msra.mxu0 0.0
      %351 = vmatprep.subr.mxu0 0.0
      %352 = vmatpush1.msra.mxu0 0.0
      %353 = vmatprep.subr.mxu0 0.0
      %354 = vmatpush1.msra.mxu0 0.0
      %355 = vmatprep.subr.mxu0 0.0
      %356 = vmatpush1.msra.mxu0 0.0
      %357 = vmatprep.subr.mxu0 0.0
      %358 = vmatpush1.msra.mxu0 0.0
      %359 = vmatprep.subr.mxu0 0.0
      %360 = vmatpush1.msra.mxu0 0.0
      %361 = vmatprep.subr.mxu0 0.0
      %362 = vmatpush1.msra.mxu0 0.0
      %363 = vmatprep.subr.mxu0 0.0
      %364 = vmatpush1.msra.mxu0 0.0
      %365 = vmatprep.subr.mxu0 0.0
      %366 = vmatpush1.msra.mxu0 0.0
      %367 = vmatprep.subr.mxu0 0.0
      %368 = vmatpush1.msra.mxu0 0.0
      %369 = vmatprep.subr.mxu0 0.0
      %370 = vmatpush1.msra.mxu0 0.0
      %371 = vmatprep.mubr.f32.mxu0 0.0
      %372 = vmatmul.mubr.f32.gmra.mrb[0].mxu0 %v302
      %v373 = vpop.f32.mrb[0].mxu0
      %v374 = vadd.f32 %v293, %v373
      %v375 = vpop.f32.mrb[0].mxu0
      %v376 = vadd.f32 %v297, %v375
      %377 = vmatprep.mubr.f32.mxu0 0.0
      %378 = vmatmul.mubr.f32.gmra.mrb[0].mxu0 %v305
      %v379 = vpop.f32.mrb[0].mxu0
      %v380 = vadd.f32 %v293, %v379
      %v381 = vpop.f32.mrb[0].mxu0
      %v382 = vadd.f32 %v297, %v381
      %383 = vdwg.mxu0
      %v384 = vtanh.pop %v374
      %v385 = vtanh.pop %v376
      %v386 = vtanh.pop %v380
      %v387 = vtanh.pop %v382
      %v388 = vld [vmem:[%s3] sm:$0xff]
      %v389 = vld [vmem:[%s3 + $0x8] sm:$0xff]
      %v390 = vld [vmem:[%s3 + $0x10] sm:$0xff]
      %v391 = vld [vmem:[%s3 + $0x18] sm:$0xff]
      %v392 = vld [vmem:[%s3 + $0x20] sm:$0xff]
      %v393 = vld [vmem:[%s3 + $0x28] sm:$0xff]
      %v394 = vld [vmem:[%s3 + $0x30] sm:$0xff]
      %v395 = vld [vmem:[%s3 + $0x38] sm:$0xff]
      %v396 = vld [vmem:[%s3 + $0x40] sm:$0xff]
      %v397 = vld [vmem:[%s3 + $0x48] sm:$0xff]
      %v398 = vld [vmem:[%s3 + $0x50] sm:$0xff]
      %v399 = vld [vmem:[%s3 + $0x58] sm:$0xff]
      %v400 = vld [vmem:[%s3 + $0x60] sm:$0xff]
      %v401 = vld [vmem:[%s3 + $0x68] sm:$0xff]
      %v402 = vld [vmem:[%s3 + $0x70] sm:$0xff]
      %v403 = vld [vmem:[%s3 + $0x78] sm:$0xff]
      %v404 = vld [vmem:[%s3 + $0x80] sm:$0xff]
      %v405 = vld [vmem:[%s3 + $0x88] sm:$0xff]
      %v406 = vld [vmem:[%s3 + $0x90] sm:$0xff]
      %v407 = vld [vmem:[%s3 + $0x98] sm:$0xff]
      %v408 = vld [vmem:[%s3 + $0xa0] sm:$0xff]
      %v409 = vld [vmem:[%s3 + $0xa8] sm:$0xff]
      %v410 = vld [vmem:[%s3 + $0xb0] sm:$0xff]
      %v411 = vld [vmem:[%s3 + $0xb8] sm:$0xff]
      %v412 = vld [vmem:[%s3 + $0xc0] sm:$0xff]
      %v413 = vld [vmem:[%s3 + $0xc8] sm:$0xff]
      %v414 = vld [vmem:[%s3 + $0xd0] sm:$0xff]
      %v415 = vld [vmem:[%s3 + $0xd8] sm:$0xff]
      %v416 = vld [vmem:[%s3 + $0xe0] sm:$0xff]
      %v417 = vld [vmem:[%s3 + $0xe8] sm:$0xff]
      %v418 = vld [vmem:[%s3 + $0xf0] sm:$0xff]
      %v419 = vld [vmem:[%s3 + $0xf8] sm:$0xff]
      %v420 = vld [vmem:[%s3 + $0x100] sm:$0xff]
      %v421 = vld [vmem:[%s3 + $0x108] sm:$0xff]
      %v422 = vld [vmem:[%s3 + $0x110] sm:$0xff]
      %v423 = vld [vmem:[%s3 + $0x118] sm:$0xff]
      %v424 = vld [vmem:[%s3 + $0x120] sm:$0xff]
      %v425 = vld [vmem:[%s3 + $0x128] sm:$0xff]
      %v426 = vld [vmem:[%s3 + $0x130] sm:$0xff]
      %v427 = vld [vmem:[%s3 + $0x138] sm:$0xff]
      %v428 = vld [vmem:[%s3 + $0x140] sm:$0xff]
      %v429 = vld [vmem:[%s3 + $0x148] sm:$0xff]
      %v430 = vld [vmem:[%s3 + $0x150] sm:$0xff]
      %v431 = vld [vmem:[%s3 + $0x158] sm:$0xff]
      %v432 = vld [vmem:[%s3 + $0x160] sm:$0xff]
      %v433 = vld [vmem:[%s3 + $0x168] sm:$0xff]
      %v434 = vld [vmem:[%s3 + $0x170] sm:$0xff]
      %v435 = vld [vmem:[%s3 + $0x178] sm:$0xff]
      %v436 = vld [vmem:[%s3 + $0x180] sm:$0xff]
      %v437 = vld [vmem:[%s3 + $0x188] sm:$0xff]
      %v438 = vld [vmem:[%s3 + $0x190] sm:$0xff]
      %v439 = vld [vmem:[%s3 + $0x198] sm:$0xff]
      %v440 = vld [vmem:[%s3 + $0x1a0] sm:$0xff]
      %v441 = vld [vmem:[%s3 + $0x1a8] sm:$0xff]
      %v442 = vld [vmem:[%s3 + $0x1b0] sm:$0xff]
      %v443 = vld [vmem:[%s3 + $0x1b8] sm:$0xff]
      %v444 = vld [vmem:[%s3 + $0x1c0] sm:$0xff]
      %v445 = vld [vmem:[%s3 + $0x1c8] sm:$0xff]
      %v446 = vld [vmem:[%s3 + $0x1d0] sm:$0xff]
      %v447 = vld [vmem:[%s3 + $0x1d8] sm:$0xff]
      %v448 = vld [vmem:[%s3 + $0x1e0] sm:$0xff]
      %v449 = vld [vmem:[%s3 + $0x1e8] sm:$0xff]
      %v450 = vld [vmem:[%s3 + $0x1f0] sm:$0xff]
      %v451 = vld [vmem:[%s3 + $0x1f8] sm:$0xff]
      %v452 = vld [vmem:[%s4] sm:$0x3]
      %v454 = vlaneseq
      %v455 = vshrl.u32 %v454, 7
      %v456 = vsub.s32 0, %v455
      %v457 = vrot.slane %v452, %v456
      %v458 = vlaneseq
      %v459 = vshrl.u32 %v458, 7
      %v460 = vsub.s32 1, %v459
      %v461 = vrot.slane %v452, %v460
      %464 = vmatprep.subr.mxu0 %v389
      %465 = vmatpush1.msra.mxu0 %v388
      %466 = vmatprep.subr.mxu0 %v391
      %467 = vmatpush1.msra.mxu0 %v390
      %468 = vmatprep.subr.mxu0 %v393
      %469 = vmatpush1.msra.mxu0 %v392
      %470 = vmatprep.subr.mxu0 %v395
      %471 = vmatpush1.msra.mxu0 %v394
      %472 = vmatprep.subr.mxu0 %v397
      %473 = vmatpush1.msra.mxu0 %v396
      %474 = vmatprep.subr.mxu0 %v399
      %475 = vmatpush1.msra.mxu0 %v398
      %476 = vmatprep.subr.mxu0 %v401
      %477 = vmatpush1.msra.mxu0 %v400
      %478 = vmatprep.subr.mxu0 %v403
      %479 = vmatpush1.msra.mxu0 %v402
      %480 = vmatprep.subr.mxu0 %v405
      %481 = vmatpush1.msra.mxu0 %v404
      %482 = vmatprep.subr.mxu0 %v407
      %483 = vmatpush1.msra.mxu0 %v406
      %484 = vmatprep.subr.mxu0 %v409
      %485 = vmatpush1.msra.mxu0 %v408
      %486 = vmatprep.subr.mxu0 %v411
      %487 = vmatpush1.msra.mxu0 %v410
      %488 = vmatprep.subr.mxu0 %v413
      %489 = vmatpush1.msra.mxu0 %v412
      %490 = vmatprep.subr.mxu0 %v415
      %491 = vmatpush1.msra.mxu0 %v414
      %492 = vmatprep.subr.mxu0 %v417
      %493 = vmatpush1.msra.mxu0 %v416
      %494 = vmatprep.subr.mxu0 %v419
      %495 = vmatpush1.msra.mxu0 %v418
      %496 = vmatprep.subr.mxu0 %v421
      %497 = vmatpush1.msra.mxu0 %v420
      %498 = vmatprep.subr.mxu0 %v423
      %499 = vmatpush1.msra.mxu0 %v422
      %500 = vmatprep.subr.mxu0 %v425
      %501 = vmatpush1.msra.mxu0 %v424
      %502 = vmatprep.subr.mxu0 %v427
      %503 = vmatpush1.msra.mxu0 %v426
      %504 = vmatprep.subr.mxu0 %v429
      %505 = vmatpush1.msra.mxu0 %v428
      %506 = vmatprep.subr.mxu0 %v431
      %507 = vmatpush1.msra.mxu0 %v430
      %508 = vmatprep.subr.mxu0 %v433
      %509 = vmatpush1.msra.mxu0 %v432
      %510 = vmatprep.subr.mxu0 %v435
      %511 = vmatpush1.msra.mxu0 %v434
      %512 = vmatprep.subr.mxu0 %v437
      %513 = vmatpush1.msra.mxu0 %v436
      %514 = vmatprep.subr.mxu0 %v439
      %515 = vmatpush1.msra.mxu0 %v438
      %516 = vmatprep.subr.mxu0 %v441
      %517 = vmatpush1.msra.mxu0 %v440
      %518 = vmatprep.subr.mxu0 %v443
      %519 = vmatpush1.msra.mxu0 %v442
      %520 = vmatprep.subr.mxu0 %v445
      %521 = vmatpush1.msra.mxu0 %v444
      %522 = vmatprep.subr.mxu0 %v447
      %523 = vmatpush1.msra.mxu0 %v446
      %524 = vmatprep.subr.mxu0 %v449
      %525 = vmatpush1.msra.mxu0 %v448
      %526 = vmatprep.subr.mxu0 %v451
      %527 = vmatpush1.msra.mxu0 %v450
      %528 = vmatprep.mubr.f32.mxu0 %v385
      %529 = vmatmul.mubr.f32.gmra.mrb[0].mxu0 %v384
      %v530 = vpop.f32.mrb[0].mxu0
      %v531 = vadd.f32 %v457, %v530
      %v532 = vpop.f32.mrb[0].mxu0
      %v533 = vadd.f32 %v461, %v532
      %534 = vmatprep.mubr.f32.mxu0 %v387
      %535 = vmatmul.mubr.f32.gmra.mrb[0].mxu0 %v386
      %v536 = vpop.f32.mrb[0].mxu0
      %v537 = vadd.f32 %v457, %v536
      %v538 = vpop.f32.mrb[0].mxu0
      %v539 = vadd.f32 %v461, %v538
      %540 = vdwg.mxu0
      %v541 = vtanh.pop %v531
      %v542 = vtanh.pop %v533
      %v543 = vtanh.pop %v537
      %v544 = vtanh.pop %v539
      %v545 = vld [vmem:[%s5] sm:$0xff]
      %v546 = vld [vmem:[%s5 + $0x8] sm:$0xff]
      %v547 = vld [vmem:[%s5 + $0x10] sm:$0xff]
      %v548 = vld [vmem:[%s5 + $0x18] sm:$0xff]
      %v549 = vld [vmem:[%s5 + $0x20] sm:$0xff]
      %v550 = vld [vmem:[%s5 + $0x28] sm:$0xff]
      %v551 = vld [vmem:[%s5 + $0x30] sm:$0xff]
      %v552 = vld [vmem:[%s5 + $0x38] sm:$0xff]
      %v553 = vld [vmem:[%s5 + $0x40] sm:$0xff]
      %v554 = vld [vmem:[%s5 + $0x48] sm:$0xff]
      %v555 = vld [vmem:[%s5 + $0x50] sm:$0xff]
      %v556 = vld [vmem:[%s5 + $0x58] sm:$0xff]
      %v557 = vld [vmem:[%s5 + $0x60] sm:$0xff]
      %v558 = vld [vmem:[%s5 + $0x68] sm:$0xff]
      %v559 = vld [vmem:[%s5 + $0x70] sm:$0xff]
      %v560 = vld [vmem:[%s5 + $0x78] sm:$0xff]
      %v561 = vld [vmem:[%s5 + $0x80] sm:$0xff]
      %v562 = vld [vmem:[%s5 + $0x88] sm:$0xff]
      %v563 = vld [vmem:[%s5 + $0x90] sm:$0xff]
      %v564 = vld [vmem:[%s5 + $0x98] sm:$0xff]
      %v565 = vld [vmem:[%s5 + $0xa0] sm:$0xff]
      %v566 = vld [vmem:[%s5 + $0xa8] sm:$0xff]
      %v567 = vld [vmem:[%s5 + $0xb0] sm:$0xff]
      %v568 = vld [vmem:[%s5 + $0xb8] sm:$0xff]
      %v569 = vld [vmem:[%s5 + $0xc0] sm:$0xff]
      %v570 = vld [vmem:[%s5 + $0xc8] sm:$0xff]
      %v571 = vld [vmem:[%s5 + $0xd0] sm:$0xff]
      %v572 = vld [vmem:[%s5 + $0xd8] sm:$0xff]
      %v573 = vld [vmem:[%s5 + $0xe0] sm:$0xff]
      %v574 = vld [vmem:[%s5 + $0xe8] sm:$0xff]
      %v575 = vld [vmem:[%s5 + $0xf0] sm:$0xff]
      %v576 = vld [vmem:[%s5 + $0xf8] sm:$0xff]
      %v577 = vld [vmem:[%s6] sm:$0x1]
      %v579 = vlaneseq
      %v580 = vshrl.u32 %v579, 7
      %v581 = vsub.s32 0, %v580
      %v582 = vrot.slane %v577, %v581
      %584 = vmatprep.subr.mxu0 0.0
      %585 = vmatpush1.msra.mxu0 %v545
      %586 = vmatprep.subr.mxu0 0.0
      %587 = vmatpush1.msra.mxu0 %v546
      %588 = vmatprep.subr.mxu0 0.0
      %589 = vmatpush1.msra.mxu0 %v547
      %590 = vmatprep.subr.mxu0 0.0
      %591 = vmatpush1.msra.mxu0 %v548
      %592 = vmatprep.subr.mxu0 0.0
      %593 = vmatpush1.msra.mxu0 %v549
      %594 = vmatprep.subr.mxu0 0.0
      %595 = vmatpush1.msra.mxu0 %v550
      %596 = vmatprep.subr.mxu0 0.0
      %597 = vmatpush1.msra.mxu0 %v551
      %598 = vmatprep.subr.mxu0 0.0
      %599 = vmatpush1.msra.mxu0 %v552
      %600 = vmatprep.subr.mxu0 0.0
      %601 = vmatpush1.msra.mxu0 %v553
      %602 = vmatprep.subr.mxu0 0.0
      %603 = vmatpush1.msra.mxu0 %v554
      %604 = vmatprep.subr.mxu0 0.0
      %605 = vmatpush1.msra.mxu0 %v555
      %606 = vmatprep.subr.mxu0 0.0
      %607 = vmatpush1.msra.mxu0 %v556
      %608 = vmatprep.subr.mxu0 0.0
      %609 = vmatpush1.msra.mxu0 %v557
      %610 = vmatprep.subr.mxu0 0.0
      %611 = vmatpush1.msra.mxu0 %v558
      %612 = vmatprep.subr.mxu0 0.0
      %613 = vmatpush1.msra.mxu0 %v559
      %614 = vmatprep.subr.mxu0 0.0
      %615 = vmatpush1.msra.mxu0 %v560
      %616 = vmatprep.subr.mxu0 0.0
      %617 = vmatpush1.msra.mxu0 %v561
      %618 = vmatprep.subr.mxu0 0.0
      %619 = vmatpush1.msra.mxu0 %v562
      %620 = vmatprep.subr.mxu0 0.0
      %621 = vmatpush1.msra.mxu0 %v563
      %622 = vmatprep.subr.mxu0 0.0
      %623 = vmatpush1.msra.mxu0 %v564
      %624 = vmatprep.subr.mxu0 0.0
      %625 = vmatpush1.msra.mxu0 %v565
      %626 = vmatprep.subr.mxu0 0.0
      %627 = vmatpush1.msra.mxu0 %v566
      %628 = vmatprep.subr.mxu0 0.0
      %629 = vmatpush1.msra.mxu0 %v567
      %630 = vmatprep.subr.mxu0 0.0
      %631 = vmatpush1.msra.mxu0 %v568
      %632 = vmatprep.subr.mxu0 0.0
      %633 = vmatpush1.msra.mxu0 %v569
      %634 = vmatprep.subr.mxu0 0.0
      %635 = vmatpush1.msra.mxu0 %v570
      %636 = vmatprep.subr.mxu0 0.0
      %637 = vmatpush1.msra.mxu0 %v571
      %638 = vmatprep.subr.mxu0 0.0
      %639 = vmatpush1.msra.mxu0 %v572
      %640 = vmatprep.subr.mxu0 0.0
      %641 = vmatpush1.msra.mxu0 %v573
      %642 = vmatprep.subr.mxu0 0.0
      %643 = vmatpush1.msra.mxu0 %v574
      %644 = vmatprep.subr.mxu0 0.0
      %645 = vmatpush1.msra.mxu0 %v575
      %646 = vmatprep.subr.mxu0 0.0
      %647 = vmatpush1.msra.mxu0 %v576
      %648 = vmatprep.mubr.f32.mxu0 %v542
      %649 = vmatmul.mubr.f32.gmra.mrb[0].mxu0 %v541
      %v650 = vpop.f32.mrb[0].mxu0
      %v651 = vadd.f32 %v582, %v650
      %v652 = vpop.f32.mrb[0].mxu0
      %653 = vmatprep.mubr.f32.mxu0 %v544
      %654 = vmatmul.mubr.f32.gmra.mrb[0].mxu0 %v543
      %v655 = vpop.f32.mrb[0].mxu0
      %v656 = vadd.f32 %v582, %v655
      %v657 = vpop.f32.mrb[0].mxu0
      %658 = vdwg.mxu0
      %659 = vst [vmem:[%s280] sm:$0xff] %v651
      %660 = vst [vmem:[%s280 + $0x8] sm:$0xff] %v656
      %s661 = smul.u32 2, %s18
      %p662 = scmp.lt.s32.totalorder %s661, 3
      %s663 = scalar_select %p662, %s661, 3
      %s664 = smul.addr %s663, 8
      %s665 = scalar_lea.vmem %s7, %s664
      // Predicated region
      $region49: #{decoder_forward.1} parent=47 // pred_check
        %p666 = pneg %p188
      $region50: #{decoder_forward.1} parent=47 // pred_check_branch
        %668 = sbr.rel (%p666) target = $region52
      $region51: #{decoder_forward.1} parent=47 // pred_region
        %s669 = smul.u32 2, %s18
      $region52: #{decoder_forward.1} parent=47 // pred_fallthru
        _
    $region48: #{decoder_forward.1} parent=5 // pred_fallthru
      _
    %p670 = scmp.le.s32.totalorder 2, %s13
    // Predicated region
    $region53: #{decoder_forward.1} parent=5 // pred_check
      %p671 = pneg %p670
    $region54: #{decoder_forward.1} parent=5 // pred_check_branch
      %673 = sbr.rel (%p671) target = $region56
    $region55: #{decoder_forward.1} parent=5 // pred_region
      %s674 = ssub.s32 %s13, 2
      // Predicated region
      $region57: #{decoder_forward.1} parent=55 // pred_check
        %p675 = pneg %p194
      $region58: #{decoder_forward.1} parent=55 // pred_check_branch
        %677 = sbr.rel (%p675) target = $region60
      $region59: #{decoder_forward.1} parent=55 // pred_region
        %s678 = smul.u32 2, %s19
        %p679 = scmp.lt.s32.totalorder %s678, 3
        %s680 = scalar_select %p679, %s678, 3
        %s681 = smul.addr %s680, 8
        %s682 = scalar_lea.vmem %s7, %s681
      $region60: #{decoder_forward.1} parent=55 // pred_fallthru
        _
    $region56: #{decoder_forward.1} parent=5 // pred_fallthru
      _
  $region6: #{decoder_forward.1} parent=0 // loop_footer
    %s17 = sadd.s32 1, %s13
  $region7: #{decoder_forward.1} parent=0 // loop_footer_branch
    %12 = sbr.rel target = $region3
  $region8: #{decoder_forward.1} parent=0 // loop_exit
    _

</llo_original>
